<compile_context>
chip_gen: v7x
topology: tpu7x:2x2x1
jax: 0.10.0
libtpu: 0.0.40
codegen_flags: <defaults>
</compile_context>

<pallas_src>
import jax
import jax.numpy as jnp
from jax.experimental import pallas as pl
from jax.experimental.pallas import tpu as pltpu


# ----------------------------- Pallas kernel ------------------------------- #

_VMEM_TILE_BUDGET = 24 * 1024 * 1024     # conservative: fits v7x (64 MiB phys)
_VMEM_LIMIT_BYTES = 32 * 1024 * 1024     # explicit scoped-VMEM limit (all gens)


def _warp_matmul_kernel(x_ref, m_ref, o_ref, acc_ref):
    # x_ref: (R, TK) bf16   m_ref: (TK, TP) bf16
    # o_ref: (R, TP) out    acc_ref: (R, TP) f32 scratch
    @pl.when(pl.program_id(1) == 0)
    def _():
        acc_ref[...] = jnp.zeros_like(acc_ref)

    acc_ref[...] += jnp.dot(x_ref[...], m_ref[...],
                            preferred_element_type=jnp.float32)

    @pl.when(pl.program_id(1) == pl.num_programs(1) - 1)
    def _():
        o_ref[...] = acc_ref[...].astype(o_ref.dtype)


def _tile_candidates(total, unit, cap):
    """Multiples of `unit` that divide `total` (ascending); [total] if none."""
    if total % unit != 0:
        return [total]
    cap = min(total, cap)
    return [t for t in range(unit, cap + 1, unit) if total % t == 0] or [total]


def _pick_tiles(R, S, Ppad, x_elem, m_elem, budget=_VMEM_TILE_BUDGET):
    """Choose (TK, TP) from divisors of S / Ppad under an explicit VMEM budget."""
    tk_opts = _tile_candidates(S, 128, 4096)
    tp_opts = _tile_candidates(Ppad, 128, 2048)
    # Keep >=2 parallel P tiles when possible so both v7x TensorCores get work.
    if Ppad >= 256:
        capped = [t for t in tp_opts if t <= Ppad // 2]
        tp_opts = capped or tp_opts

    def vmem_need(tk, tp):
        return (2 * R * tk * x_elem          # x tiles (double-buffered)
                + 3 * tk * tp * m_elem       # M tiles (up to 3-deep buffered)
                + 2 * R * tp * 4             # output tiles
                + R * tp * 4)                # f32 accumulator scratch

    best = (tk_opts[0], tp_opts[0])
    for tk in tk_opts:
        for tp in tp_opts:
            if vmem_need(tk, tp) <= budget and tk * tp > best[0] * best[1]:
                best = (tk, tp)
    return best


def _m_block_spec(TK, TP, n_steps):
    """Streamed-operand spec: ask for 3-deep buffering to hide M's HBM DMA."""
    idx_map = lambda j, k: (k, j)
    buffered = getattr(pl, "Buffered", None)
    if buffered is not None and n_steps >= 3:
        try:
            return pl.BlockSpec((TK, TP), idx_map, pipeline_mode=buffered(3))
        except TypeError:
            pass                             # older BlockSpec without pipeline_mode
    return pl.BlockSpec((TK, TP), idx_map)


def warp_apply_pallas(x, M, Hout, Wout):
    """out[n, c] = x[n, c].reshape(-1) @ M[:, :Hout*Wout], reshaped to (Hout, Wout)."""
    N, C, H, W = x.shape
    S = H * W
    P = Hout * Wout
    Ppad = M.shape[1]
    assert M.shape[0] == S and Ppad % 128 == 0 and Ppad >= P

    # Fold batch+channels into matmul rows.  No row padding: full-extent blocks
    # along R are exempt from the (8,128) divisibility rule, so we avoid the
    # wrapper-side pad + slice of v1.  Callers with many frames sharing one
    # flow should stack them along N so R >= 128/256 feeds the full MXU.
    R = N * C
    x2d = x.reshape(R, S).astype(jnp.bfloat16)   # bf16 stream, f32 accumulation
    Mb = M.astype(jnp.bfloat16)

    TK, TP = _pick_tiles(R, S, Ppad, x_elem=2, m_elem=2)
    grid = (Ppad // TP, S // TK)                 # reduction (K) axis last
    n_steps = grid[0] * grid[1]

    out2d = pl.pallas_call(
        _warp_matmul_kernel,
        out_shape=jax.ShapeDtypeStruct((R, Ppad), x.dtype),
        grid_spec=pltpu.PrefetchScalarGridSpec(
            num_scalar_prefetch=0,
            grid=grid,
            in_specs=[
                pl.BlockSpec((R, TK), lambda j, k: (0, k)),   # x: K-tiled rows
                _m_block_spec(TK, TP, n_steps),               # M: (k, j) tile
            ],
            out_specs=pl.BlockSpec((R, TP), lambda j, k: (0, j)),
            scratch_shapes=[pltpu.VMEM((R, TP), jnp.float32)],
        ),
        compiler_params=pltpu.CompilerParams(
            dimension_semantics=("parallel", "arbitrary"),
            vmem_limit_bytes=_VMEM_LIMIT_BYTES,
        ),
    )(x2d, Mb)

    if Ppad != P:                                # zero columns added at build time
        out2d = out2d[:, :P]
    return out2d.reshape(N, C, Hout, Wout)


# ----------------- One-time scatter-matrix construction (XLA) -------------- #

def build_warp_matrix(fine_grid, H, W, dtype=jnp.bfloat16):
    """Bilinear grid_sample (align_corners=False, zeros padding) as a matrix.

    fine_grid: [1, Hout, Wout, 2] normalized coords (PyTorch convention, last
    dim = (x, y)).  Returns M of shape [H*W, Ppad] with Ppad = round_up(P, 128)
    (extra columns are zeros so the kernel's output tiles stay lane-dense),
    such that grid_sample(x)[c].ravel() == x[c].ravel() @ M[:, :P].

    Built separably (Wy[H,P] x Wx[W,P]) and only once per flow.
    """
    Hout, Wout = fine_grid.shape[1], fine_grid.shape[2]
    P = Hout * Wout
    gx = fine_grid[0, ..., 0].reshape(P).astype(jnp.float32)
    gy = fine_grid[0, ..., 1].reshape(P).astype(jnp.float32)

    # align_corners=False unnormalization (PyTorch convention)
    ix = ((gx + 1.0) * W - 1.0) * 0.5
    iy = ((gy + 1.0) * H - 1.0) * 0.5

    x0 = jnp.floor(ix)
    y0 = jnp.floor(iy)
    wx1 = ix - x0
    wx0 = 1.0 - wx1
    wy1 = iy - y0
    wy0 = 1.0 - wy1

    # Clip to [-1, size] before the int cast: out-of-range corners land on
    # indices that never match the iota -> zeros padding handled implicitly.
    x0i = jnp.clip(x0, -1.0, float(W)).astype(jnp.int32)
    x1i = jnp.clip(x0 + 1.0, -1.0, float(W)).astype(jnp.int32)
    y0i = jnp.clip(y0, -1.0, float(H)).astype(jnp.int32)
    y1i = jnp.clip(y0 + 1.0, -1.0, float(H)).astype(jnp.int32)

    w_iota = jnp.arange(W, dtype=jnp.int32)[:, None]          # [W, 1]
    h_iota = jnp.arange(H, dtype=jnp.int32)[:, None]          # [H, 1]

    Wx = (jnp.where(w_iota == x0i[None, :], wx0[None, :], 0.0)
          + jnp.where(w_iota == x1i[None, :], wx1[None, :], 0.0))   # [W, P]
    Wy = (jnp.where(h_iota == y0i[None, :], wy0[None, :], 0.0)
          + jnp.where(h_iota == y1i[None, :], wy1[None, :], 0.0))   # [H, P]

    # TODO(synk): for large H*W this dense [S, P] M (and the [H, W, P] outer
    # product) is O(S*P); switch to a banded / block-sparse M with per-P-tile
    # row offsets fed via PrefetchScalarGridSpec before scaling resolution.
    M = (Wy[:, None, :] * Wx[None, :, :]).reshape(H * W, P)         # [S, P]

    Ppad = ((P + 127) // 128) * 128
    if Ppad != P:
        M = jnp.pad(M, ((0, 0), (0, Ppad - P)))                     # lane-dense tiles
    return M.astype(dtype)


# --------------------------- Module-equivalent glue ------------------------ #

class FlowWarpingNet:
    """JAX/Pallas port of the PyTorch FlowWarpingNet (forward = grid_sample)."""

    def __init__(self, output_size=(16, 16)):
        self.img_size = output_size
        W_out, H_out = output_size[0], output_size[1]
        # Reproduce the PyTorch grid construction: grid[0] = x (column), grid[1] = y (row).
        xx = jnp.tile(jnp.arange(W_out, dtype=jnp.float32)[None, :], (H_out, 1))
        yy = jnp.tile(jnp.arange(H_out, dtype=jnp.float32)[:, None], (1, W_out))
        self.grid = jnp.stack([xx, yy], axis=0)            # [2, H_out, W_out]
        self.scale_x = 0.25
        self.scale_y = 0.25
        self.fine_grid = None
        self._warp_mats = {}                               # (H, W) -> bf16 scatter matrix

    def set_flow(self, flow):
        # flow: [1, 2, h, w].
        # TODO(synk): cv2.resize(bilinear) is approximated with jax.image.resize;
        # results are identical when flow already has the output resolution.
        u = jax.image.resize(flow[0, 0], (self.img_size[1], self.img_size[0]),
                             method="bilinear") * self.scale_x
        v = jax.image.resize(flow[0, 1], (self.img_size[1], self.img_size[0]),
                             method="bilinear") * self.scale_y
        up_flow = jnp.stack([u, v], axis=-1)[None]                     # [1, H, W, 2]
        coarse_grid = jnp.transpose(self.grid[None], (0, 2, 3, 1)) + up_flow
        # NOTE: both coords normalized by (img_size[1]-1), exactly as the
        # original PyTorch module does (kept to preserve forward semantics).
        self.fine_grid = 2.0 * coarse_grid / (self.img_size[1] - 1) - 1.0
        self._warp_mats = {}    # flow changed -> drop cached scatter matrices

    def _warp_matrix(self, H, W):
        key = (H, W)
        if key not in self._warp_mats:
            # One-time build (bf16), amortized over every subsequent __call__.
            self._warp_mats[key] = build_warp_matrix(self.fine_grid, H, W)
        return self._warp_mats[key]

    def __call__(self, x):
        N, C, H, W = x.shape
        Hout, Wout = self.fine_grid.shape[1], self.fine_grid.shape[2]
        M = self._warp_matrix(H, W)
        # The batch-1 grid (as produced by setFlow) is shared by all batch rows.
        return warp_apply_pallas(x, M, Hout, Wout)


# ------------------------------ JAX reference ------------------------------ #

def _ref_grid_sample_one(xb, gb):
    # xb: [C, H, W], gb: [Hout, Wout, 2]
    C, H, W = xb.shape
    gx, gy = gb[..., 0], gb[..., 1]
    ix = ((gx + 1.0) * W - 1.0) * 0.5
    iy = ((gy + 1.0) * H - 1.0) * 0.5
    x0 = jnp.floor(ix)
    y0 = jnp.floor(iy)
    x1, y1 = x0 + 1.0, y0 + 1.0

    def g(xc, yc, w):
        valid = (xc >= 0) & (xc <= W - 1) & (yc >= 0) & (yc <= H - 1)
        xi = jnp.clip(xc, 0, W - 1).astype(jnp.int32)
        yi = jnp.clip(yc, 0, H - 1).astype(jnp.int32)
        vals = xb[:, yi, xi]                               # [C, Hout, Wout]
        return vals * (w * valid)[None]

    return (g(x0, y0, (x1 - ix) * (y1 - iy)) + g(x1, y0, (ix - x0) * (y1 - iy))
            + g(x0, y1, (x1 - ix) * (iy - y0)) + g(x1, y1, (ix - x0) * (iy - y0)))


def _ref_grid_sample(x, grid):
    return jax.vmap(_ref_grid_sample_one)(x, grid)


# ---------------------------------- Main ----------------------------------- #

if __name__ == "__main__":
    key = jax.random.PRNGKey(0)
    k1, k2 = jax.random.split(key)

    img_size = (16, 16)                   # small Output_Size (W, H)
    N, C, H, W = 2, 4, 16, 16             # R = N*C rows folded into one matmul

    x = jax.random.normal(k1, (N, C, H, W), dtype=jnp.float32)
    flow = jax.random.normal(k2, (1, 2, img_size[1], img_size[0]), dtype=jnp.float32) * 3.0

    net = FlowWarpingNet(output_size=img_size)
    net.set_flow(flow)

    out = net(x)
    out = jax.block_until_ready(out)

    # Reference: apply the shared batch-1 grid to every batch element (f32).
    grid_b = jnp.broadcast_to(net.fine_grid, (N,) + net.fine_grid.shape[1:])
    ref = _ref_grid_sample(x, grid_b)

    assert out.shape == (N, C, img_size[1], img_size[0])
    # Operands are streamed as bf16 (f32 MXU accumulation) -> relaxed tolerance.
    assert jnp.allclose(out, ref, atol=3e-2, rtol=3e-2), "mismatch vs JAX reference"

    print("KERNEL_OK")
</pallas_src>

<mosaic_0001>
module attributes {stable_mosaic.version = 11 : i64} {
  func.func @_warp_matmul_kernel(%arg0: i32, %arg1: i32, %arg2: memref<8x256xbf16, #tpu.memory_space<vmem>>, %arg3: memref<256x128xbf16, #tpu.memory_space<vmem>>, %arg4: memref<8x128xf32, #tpu.memory_space<vmem>>, %arg5: memref<8x128xf32, #tpu.memory_space<vmem>>) attributes {dimension_semantics = [#tpu.dimension_semantics<parallel>, #tpu.dimension_semantics<arbitrary>], iteration_bounds = array<i64: 2, 1>, scalar_prefetch = 0 : i64, scratch_operands = 1 : i64, tpu.core_type = #tpu.core_type<tc>, window_params = [{transform_indices = @transform_0, window_bounds = array<i64: 8, 256>}, {transform_indices = @transform_1, window_bounds = array<i64: 256, 128>}, {transform_indices = @transform_2, window_bounds = array<i64: 8, 128>}]} {
    %c0_i32 = arith.constant 0 : i32
    %0 = arith.cmpi eq, %arg1, %c0_i32 : i32
    %1 = arith.extui %0 : i1 to i32
    %c0_i32_0 = arith.constant 0 : i32
    %2 = arith.cmpi ne, %1, %c0_i32_0 : i32
    scf.if %2 {
      %cst_10 = arith.constant 0.000000e+00 : f32
      %12 = vector.broadcast %cst_10 : f32 to vector<8x128xf32>
      %c0_11 = arith.constant 0 : index
      %c0_12 = arith.constant 0 : index
      %13 = vector.load %arg5[%c0_11, %c0_12] : memref<8x128xf32, #tpu.memory_space<vmem>>, vector<8x128xf32>
      tpu.vector_store %arg5[%c0_11, %c0_12], %12 {strides = array<i32>} : memref<8x128xf32, #tpu.memory_space<vmem>>, vector<8x128xf32>,
    } else {
    }
    %c0 = arith.constant 0 : index
    %c0_1 = arith.constant 0 : index
    %3 = vector.load %arg5[%c0, %c0_1] : memref<8x128xf32, #tpu.memory_space<vmem>>, vector<8x128xf32>
    %c0_2 = arith.constant 0 : index
    %c0_3 = arith.constant 0 : index
    %4 = vector.load %arg2[%c0_2, %c0_3] : memref<8x256xbf16, #tpu.memory_space<vmem>>, vector<8x256xbf16>
    %c0_4 = arith.constant 0 : index
    %c0_5 = arith.constant 0 : index
    %5 = vector.load %arg3[%c0_4, %c0_5] : memref<256x128xbf16, #tpu.memory_space<vmem>>, vector<256x128xbf16>
    %cst = arith.constant dense<0.000000e+00> : vector<8x128xf32>
    %6 = tpu.matmul %4, %5, %cst {dimension_numbers = #tpu.dot_dimension_numbers<[1], [0], [0], [1], [0, 0, 1, 1], [], []>} : vector<8x256xbf16>, vector<256x128xbf16>, vector<8x128xf32> -> vector<8x128xf32>
    %7 = arith.addf %3, %6 : vector<8x128xf32>
    %c0_6 = arith.constant 0 : index
    %c0_7 = arith.constant 0 : index
    %8 = vector.load %arg5[%c0_6, %c0_7] : memref<8x128xf32, #tpu.memory_space<vmem>>, vector<8x128xf32>
    tpu.vector_store %arg5[%c0_6, %c0_7], %7 {strides = array<i32>} : memref<8x128xf32, #tpu.memory_space<vmem>>, vector<8x128xf32>,
    %c0_i32_8 = arith.constant 0 : i32
    %9 = arith.cmpi eq, %arg1, %c0_i32_8 : i32
    %10 = arith.extui %9 : i1 to i32
    %c0_i32_9 = arith.constant 0 : i32
    %11 = arith.cmpi ne, %10, %c0_i32_9 : i32
    scf.if %11 {
      %c0_10 = arith.constant 0 : index
      %c0_11 = arith.constant 0 : index
      %12 = vector.load %arg5[%c0_10, %c0_11] : memref<8x128xf32, #tpu.memory_space<vmem>>, vector<8x128xf32>
      %c0_12 = arith.constant 0 : index
      %c0_13 = arith.constant 0 : index
      %13 = vector.load %arg4[%c0_12, %c0_13] : memref<8x128xf32, #tpu.memory_space<vmem>>, vector<8x128xf32>
      tpu.vector_store %arg4[%c0_12, %c0_13], %12 {strides = array<i32>} : memref<8x128xf32, #tpu.memory_space<vmem>>, vector<8x128xf32>,
    } else {
    }
    return
  }
  func.func @transform_0(%arg0: i32, %arg1: i32) -> (i32, i32) {
    %c0_i32 = arith.constant 0 : i32
    %c0_i32_0 = arith.constant 0 : i32
    return %c0_i32, %arg1 : i32, i32
  }
  func.func @transform_1(%arg0: i32, %arg1: i32) -> (i32, i32) {
    %c0_i32 = arith.constant 0 : i32
    return %arg1, %arg0 : i32, i32
  }
  func.func @transform_2(%arg0: i32, %arg1: i32) -> (i32, i32) {
    %c0_i32 = arith.constant 0 : i32
    %c0_i32_0 = arith.constant 0 : i32
    return %c0_i32, %arg0 : i32, i32
  }
}

</mosaic_0001>

<llo_original>
// kernel: tpu_custom_call.1
$region0: #{tpu_custom_call.1}
  #allocation0 [shape = 'u32[]', space=smem, size = 0x4, offset = 0x4, fixed_abs, tag = 'smem constant byte address 0x4 - core index']
  #allocation1 [shape = 'u32[144,128]{1,0:T(1,128)}', space=vmem, size = 0x12000, scoped, tag = 'internal scratch']
  #allocation2 [shape = 'f32[8,128]{1,0:T(8,128)}', space=vmem, size = 0x1000, scoped, tag = 'scratch operand']
  %s0 = inlined_call_operand.hbm [shape: bf16[8,256], index: 0, kind: input, shape index: {}]
  %s1 = inlined_call_operand.hbm [shape: bf16[256,256], index: 1, kind: input, shape index: {}]
  %s2 = inlined_call_operand.hbm [shape: f32[8,256], index: 2, kind: output, shape index: {}]
  %s3 = sld [smem:[#allocation0]]
  $region57: #{tpu_custom_call.1} parent=0
    _
  %s5 = ssub.s32 1, %s3
  %s6 = scalar_select 0, %s5, %s3
  $region1: #{tpu_custom_call.1} parent=0
    #allocation3 [shape = 'u8[4096]{0}', space=vmem, size = 0x1000, scoped, tag = 'input window, operand 0, single buffered']
    #allocation4 [shape = 's32[2]{0}', space=sflag, size = 0x8, scoped, tag = 'scoped memory for tpu_custom_call.1']
    #allocation5 [shape = 's32[2]{0}', space=sflag, size = 0x8, scoped, tag = 'scoped memory for tpu_custom_call.1']
    #allocation6 [shape = 'u8[131072]{0}', space=vmem, size = 0x20000, scoped, tag = 'input window, operand 1']
    #allocation7 [shape = 's32[2]{0}', space=sflag, size = 0x8, scoped, tag = 'scoped memory for tpu_custom_call.1']
    #allocation8 [shape = 'u8[8192]{0}', space=vmem, size = 0x2000, scoped, tag = 'output window, operand 0']
    %7 = vsyncpa [#allocation4], 0
    %8 = vsyncpa [#allocation7], 0
    %s9 = scalar_lea.sflag [#allocation7], 1
    %10 = vsyncpa %s9, 0
    %11 = vsyncpa [#allocation5], 0
    %s12 = scalar_lea.sflag [#allocation5], 1
    %13 = vsyncpa %s12, 0
    loop: start=0, step=1, limit=4
    $region2: #{tpu_custom_call.1} parent=1 // loop_pre_header
      _
    $region3: #{tpu_custom_call.1} parent=1 // loop_header
      %s15 = sphi 0, %s19
      %p16 = scmp.ge.s32.totalorder %s15, 4
      %s22 = sphi 0, %s34
      %s23 = sphi 0, %s30
      %s24 = sphi 0, %s22
      %s25 = sphi 0, %s23
      %s26 = sphi 0, %s24
      %s27 = sphi 0, %s25
      %s37 = sphi 0, %s39
      %s40 = sphi 0, %s37
      %s41 = sphi 0, %s40
      %s57 = sphi 0, %s41
      %s65 = sphi 0, %s67
      %s68 = sphi 0, %s65
      %s69 = sphi 0, %s68
      %s85 = sphi 0, %s69
      %s91 = sphi 0, %s93
      %s94 = sphi 0, %s91
      %s95 = sphi 0, %s94
      %s111 = sphi 0, %s95
    $region4: #{tpu_custom_call.1} parent=1 // loop_header_branch
      %18 = sbr.rel (%p16) target = $region8
    $region5: #{tpu_custom_call.1} parent=1 // loop_body
      %s20 = ssub.s32 %s15, 1
      %s21 = ssub.s32 %s15, 2
      %s28 = sadd.s32 1, %s23
      %p29 = scmp.ge.s32.totalorder %s28, 1
      %s30 = scalar_select %p29, 0, %s28
      %s31 = sadd.s32 1, %s22
      %s32 = scalar_select %p29, %s31, %s22
      %p33 = scmp.ge.s32.totalorder %s32, 2
      %s34 = scalar_select %p33, 0, %s32
      %s35 = ssub.s32 %s23, %s30
      %p36 = scmp.eq.s32.totalorder %s35, 0
      %s38 = sadd.s32 %s37, 1
      %s39 = scalar_select %p36, %s37, %s38
      %p42 = pneg %p36
      %p43 = scmp.eq.s32.totalorder %s15, 1
      %p44 = por %p42, %p43
      %p45 = scmp.ne.s32.totalorder %s37, %s40
      %p46 = scmp.eq.s32.totalorder %s15, 0
      %p47 = por %p45, %p46
      %p48 = scmp.ne.s32.totalorder %s37, %s40
      %p49 = scmp.eq.s32.totalorder %s20, 1
      %p50 = por %p48, %p49
      %p51 = scmp.ne.s32.totalorder %s40, %s41
      %p52 = scmp.eq.s32.totalorder %s20, 0
      %p53 = por %p51, %p52
      %p54 = scmp.ne.s32.totalorder %s40, %s41
      %p55 = scmp.eq.s32.totalorder %s21, 1
      %p56 = por %p54, %p55
      %p58 = scmp.ne.s32.totalorder %s41, %s57
      %p59 = scmp.eq.s32.totalorder %s21, 0
      %p60 = por %p58, %p59
      %s61 = ssub.s32 %s23, %s30
      %s62 = ssub.s32 %s22, %s34
      %s63 = sor.u32 %s61, %s62
      %p64 = scmp.eq.s32.totalorder %s63, 0
      %s66 = sadd.s32 %s65, 1
      %s67 = scalar_select %p64, %s65, %s66
      %p70 = pneg %p64
      %p71 = scmp.eq.s32.totalorder %s15, 1
      %p72 = por %p70, %p71
      %p73 = scmp.ne.s32.totalorder %s65, %s68
      %p74 = scmp.eq.s32.totalorder %s15, 0
      %p75 = por %p73, %p74
      %p76 = scmp.ne.s32.totalorder %s65, %s68
      %p77 = scmp.eq.s32.totalorder %s20, 1
      %p78 = por %p76, %p77
      %p79 = scmp.ne.s32.totalorder %s68, %s69
      %p80 = scmp.eq.s32.totalorder %s20, 0
      %p81 = por %p79, %p80
      %p82 = scmp.ne.s32.totalorder %s68, %s69
      %p83 = scmp.eq.s32.totalorder %s21, 1
      %p84 = por %p82, %p83
      %p86 = scmp.ne.s32.totalorder %s69, %s85
      %p87 = scmp.eq.s32.totalorder %s21, 0
      %p88 = por %p86, %p87
      %s89 = ssub.s32 %s22, %s34
      %p90 = scmp.eq.s32.totalorder %s89, 0
      %s92 = sadd.s32 %s91, 1
      %s93 = scalar_select %p90, %s91, %s92
      %p96 = pneg %p90
      %p97 = scmp.eq.s32.totalorder %s15, 1
      %p98 = por %p96, %p97
      %p99 = scmp.ne.s32.totalorder %s91, %s94
      %p100 = scmp.eq.s32.totalorder %s15, 0
      %p101 = por %p99, %p100
      %p102 = scmp.ne.s32.totalorder %s91, %s94
      %p103 = scmp.eq.s32.totalorder %s20, 1
      %p104 = por %p102, %p103
      %p105 = scmp.ne.s32.totalorder %s94, %s95
      %p106 = scmp.eq.s32.totalorder %s20, 0
      %p107 = por %p105, %p106
      %p108 = scmp.ne.s32.totalorder %s94, %s95
      %p109 = scmp.eq.s32.totalorder %s21, 1
      %p110 = por %p108, %p109
      %p112 = scmp.ne.s32.totalorder %s95, %s111
      %p113 = scmp.eq.s32.totalorder %s21, 0
      %p114 = por %p112, %p113
      %p115 = scmp.le.s32.totalorder 1, %s15
      %p116 = scmp.lt.s32.totalorder %s15, 3
      %p117 = pnand %p115, %p116
      %p118 = pneg %p117
      // Predicated region
      $region9: #{tpu_custom_call.1} parent=5 // pred_check
        _
      $region10: #{tpu_custom_call.1} parent=5 // pred_check_branch
        %120 = sbr.rel (%p117) target = $region12
      $region11: #{tpu_custom_call.1} parent=5 // pred_region
        %s121 = ssub.s32 %s15, 1
        // Predicated region
        $region13: #{tpu_custom_call.1} parent=11 // pred_check
          %p122 = pneg %p53
        $region14: #{tpu_custom_call.1} parent=11 // pred_check_branch
          %124 = sbr.rel (%p122) target = $region16
        $region15: #{tpu_custom_call.1} parent=11 // pred_region
          %s125 = smul.u32 2, %s25
          %s127 = ssub.s32 128, 128
          %128 = vsyncadd [#allocation4], %s127
          %s129 = smul.addr %s125, 64
          %s130 = scalar_lea.hbm %s0, %s129
          %s132 = sshll.u32 [#allocation3], 4
          %s133 = int_to_ptr.vmem [resolvable:$true] %s132
          %135 = dma.hbm_to_vmem [thread:$0]  %s130, 128, %s133, [#allocation4]
        $region16: #{tpu_custom_call.1} parent=11 // pred_fallthru
          _
      $region12: #{tpu_custom_call.1} parent=5 // pred_fallthru
        _
      %p136 = scmp.lt.s32.totalorder %s15, 2
      // Predicated region
      $region17: #{tpu_custom_call.1} parent=5 // pred_check
        %p137 = pneg %p136
      $region18: #{tpu_custom_call.1} parent=5 // pred_check_branch
        %139 = sbr.rel (%p137) target = $region20
      $region19: #{tpu_custom_call.1} parent=5 // pred_region
        // Predicated region
        $region21: #{tpu_custom_call.1} parent=19 // pred_check
          %p140 = pneg %p75
        $region22: #{tpu_custom_call.1} parent=19 // pred_check_branch
          %142 = sbr.rel (%p140) target = $region24
        $region23: #{tpu_custom_call.1} parent=19 // pred_region
          %s143 = sand.u32 %s65, 1
          %s144 = scalar_lea.sflag [#allocation7], %s143
          %s145 = sand.u32 %s65, 1
          %s146 = smul.addr %s145, 128
          %s147 = scalar_lea.vmem [#allocation6], %s146
          %s148 = smul.u32 32, %s23
          %s150 = ssub.s32 2048, 2048
          %151 = vsyncadd %s144, %s150
          %s152 = smul.addr %s148, 2
          %s153 = sadd.s32 %s22, %s152
          %s154 = smul.addr %s153, 64
          %s155 = scalar_lea.hbm %s1, %s154
          %s156 = sshll.u32 %s147, 4
          %s157 = int_to_ptr.vmem [resolvable:$true] %s156
          %162 = dma.hbm_to_vmem [thread:$0]  %s155, 2048, %s157, %s144, 128, 64, 4
        $region24: #{tpu_custom_call.1} parent=19 // pred_fallthru
          _
      $region20: #{tpu_custom_call.1} parent=5 // pred_fallthru
        _
      %p163 = scmp.le.s32.totalorder 1, %s15
      %p164 = scmp.lt.s32.totalorder %s15, 3
      %p165 = pnand %p163, %p164
      %p166 = pneg %p165
      // Predicated region
      $region25: #{tpu_custom_call.1} parent=5 // pred_check
        _
      $region26: #{tpu_custom_call.1} parent=5 // pred_check_branch
        %168 = sbr.rel (%p165) target = $region28
      $region27: #{tpu_custom_call.1} parent=5 // pred_region
        %s169 = ssub.s32 %s15, 1
        // Predicated region
        $region29: #{tpu_custom_call.1} parent=27 // pred_check
          %p170 = pneg %p53
        $region30: #{tpu_custom_call.1} parent=27 // pred_check_branch
          %172 = sbr.rel (%p170) target = $region32
        $region31: #{tpu_custom_call.1} parent=27 // pred_region
          %173 = dma.done [#allocation4], 128
        $region32: #{tpu_custom_call.1} parent=27 // pred_fallthru
          _
        %s174 = sand.u32 %s68, 1
        %s175 = scalar_lea.sflag [#allocation7], %s174
        %s176 = sand.u32 %s68, 1
        %s177 = smul.addr %s176, 128
        %s178 = scalar_lea.vmem [#allocation6], %s177
        // Predicated region
        $region33: #{tpu_custom_call.1} parent=27 // pred_check
          %p179 = pneg %p81
        $region34: #{tpu_custom_call.1} parent=27 // pred_check_branch
          %181 = sbr.rel (%p179) target = $region36
        $region35: #{tpu_custom_call.1} parent=27 // pred_region
          %182 = dma.done %s175, 2048
        $region36: #{tpu_custom_call.1} parent=27 // pred_fallthru
          _
        %p183 = pneg %p53
        %p184 = pneg %p50
        %s185 = sand.u32 %s68, 1
        %s186 = scalar_lea.sflag [#allocation7], %s185
        %s187 = sand.u32 %s68, 1
        %s188 = smul.addr %s187, 128
        %s189 = scalar_lea.vmem [#allocation6], %s188
        %p190 = pneg %p81
        %p191 = pneg %p78
        %p192 = pneg %p107
        %p193 = pneg %p104
        %s194 = sand.u32 %s94, 1
        %s195 = scalar_lea.sflag [#allocation5], %s194
        %s196 = sand.u32 %s94, 1
        %s197 = smul.addr %s196, 8
        %s198 = scalar_lea.vmem [#allocation8], %s197
        %s199 = smul.u32 2, %s25
        %s200 = smul.u32 32, %s25
        %p202 = scmp.eq.s32.totalorder %s25, 0
        // Predicated region
        $region37: #{tpu_custom_call.1} parent=27 // pred_check
          %p203 = pneg %p202
        $region38: #{tpu_custom_call.1} parent=27 // pred_check_branch
          %205 = sbr.rel (%p203) target = $region40
        $region39: #{tpu_custom_call.1} parent=27 // pred_region
          %206 = vst [vmem:[#allocation2] sm:$0xff] 0.0
        $region40: #{tpu_custom_call.1} parent=27 // pred_fallthru
          _
        %v207 = vld [vmem:[#allocation2] sm:$0xff]
        %v208 = vld [vmem:[#allocation3] sm:$0xff]
        %v209 = vld [vmem:[%s178] sm:$0xf]
        %v210 = vld [vmem:[%s178 + $0x4] sm:$0xf]
        %v211 = vld [vmem:[%s178 + $0x8] sm:$0xf]
        %v212 = vld [vmem:[%s178 + $0xc] sm:$0xf]
        %v213 = vld [vmem:[%s178 + $0x10] sm:$0xf]
        %v214 = vld [vmem:[%s178 + $0x14] sm:$0xf]
        %v215 = vld [vmem:[%s178 + $0x18] sm:$0xf]
        %v216 = vld [vmem:[%s178 + $0x1c] sm:$0xf]
        %v217 = vld [vmem:[%s178 + $0x20] sm:$0xf]
        %v218 = vld [vmem:[%s178 + $0x24] sm:$0xf]
        %v219 = vld [vmem:[%s178 + $0x28] sm:$0xf]
        %v220 = vld [vmem:[%s178 + $0x2c] sm:$0xf]
        %v221 = vld [vmem:[%s178 + $0x30] sm:$0xf]
        %v222 = vld [vmem:[%s178 + $0x34] sm:$0xf]
        %v223 = vld [vmem:[%s178 + $0x38] sm:$0xf]
        %v224 = vld [vmem:[%s178 + $0x3c] sm:$0xf]
        %v225 = vld [vmem:[%s178 + $0x40] sm:$0xf]
        %v226 = vld [vmem:[%s178 + $0x44] sm:$0xf]
        %v227 = vld [vmem:[%s178 + $0x48] sm:$0xf]
        %v228 = vld [vmem:[%s178 + $0x4c] sm:$0xf]
        %v229 = vld [vmem:[%s178 + $0x50] sm:$0xf]
        %v230 = vld [vmem:[%s178 + $0x54] sm:$0xf]
        %v231 = vld [vmem:[%s178 + $0x58] sm:$0xf]
        %v232 = vld [vmem:[%s178 + $0x5c] sm:$0xf]
        %v233 = vld [vmem:[%s178 + $0x60] sm:$0xf]
        %v234 = vld [vmem:[%s178 + $0x64] sm:$0xf]
        %v235 = vld [vmem:[%s178 + $0x68] sm:$0xf]
        %v236 = vld [vmem:[%s178 + $0x6c] sm:$0xf]
        %v237 = vld [vmem:[%s178 + $0x70] sm:$0xf]
        %v238 = vld [vmem:[%s178 + $0x74] sm:$0xf]
        %v239 = vld [vmem:[%s178 + $0x78] sm:$0xf]
        %v240 = vld [vmem:[%s178 + $0x7c] sm:$0xf]
        %v242 = vunpack.c.l.b16 %v208
        %v243 = vunpack.c.h.b16 %v208
        %v244 = vpack.c.b16 %v242, %v242
        %v245 = vpack.c.b16 %v243, %v243
        %v280 = vunpack.c.l.b16 %v209
        %v281 = vunpack.c.l.b16 %v210
        %v282 = vunpack.c.l.b16 %v211
        %v283 = vunpack.c.l.b16 %v212
        %v284 = vunpack.c.l.b16 %v213
        %v285 = vunpack.c.l.b16 %v214
        %v286 = vunpack.c.l.b16 %v215
        %v287 = vunpack.c.l.b16 %v216
        %v288 = vunpack.c.l.b16 %v217
        %v289 = vunpack.c.l.b16 %v218
        %v290 = vunpack.c.l.b16 %v219
        %v291 = vunpack.c.l.b16 %v220
        %v292 = vunpack.c.l.b16 %v221
        %v293 = vunpack.c.l.b16 %v222
        %v294 = vunpack.c.l.b16 %v223
        %v295 = vunpack.c.l.b16 %v224
        %v296 = vunpack.c.l.b16 %v225
        %v297 = vunpack.c.l.b16 %v226
        %v298 = vunpack.c.l.b16 %v227
        %v299 = vunpack.c.l.b16 %v228
        %v300 = vunpack.c.l.b16 %v229
        %v301 = vunpack.c.l.b16 %v230
        %v302 = vunpack.c.l.b16 %v231
        %v303 = vunpack.c.l.b16 %v232
        %v304 = vunpack.c.l.b16 %v233
        %v305 = vunpack.c.l.b16 %v234
        %v306 = vunpack.c.l.b16 %v235
        %v307 = vunpack.c.l.b16 %v236
        %v308 = vunpack.c.l.b16 %v237
        %v309 = vunpack.c.l.b16 %v238
        %v310 = vunpack.c.l.b16 %v239
        %v311 = vunpack.c.l.b16 %v240
        %v312 = vpack.c.b16 %v281, %v280
        %v313 = vpack.c.b16 %v283, %v282
        %v314 = vpack.c.b16 %v285, %v284
        %v315 = vpack.c.b16 %v287, %v286
        %v316 = vpack.c.b16 %v289, %v288
        %v317 = vpack.c.b16 %v291, %v290
        %v318 = vpack.c.b16 %v293, %v292
        %v319 = vpack.c.b16 %v295, %v294
        %v320 = vpack.c.b16 %v297, %v296
        %v321 = vpack.c.b16 %v299, %v298
        %v322 = vpack.c.b16 %v301, %v300
        %v323 = vpack.c.b16 %v303, %v302
        %v324 = vpack.c.b16 %v305, %v304
        %v325 = vpack.c.b16 %v307, %v306
        %v326 = vpack.c.b16 %v309, %v308
        %v327 = vpack.c.b16 %v311, %v310
        %344 = vmatprep.subr.bf16.mxu0 0
        %345 = vmatpush1.bf16.msra.mxu0 %v312
        %346 = vmatprep.subr.bf16.mxu0 0
        %347 = vmatpush1.bf16.msra.mxu0 %v313
        %348 = vmatprep.subr.bf16.mxu0 0
        %349 = vmatpush1.bf16.msra.mxu0 %v314
        %350 = vmatprep.subr.bf16.mxu0 0
        %351 = vmatpush1.bf16.msra.mxu0 %v315
        %352 = vmatprep.subr.bf16.mxu0 0
        %353 = vmatpush1.bf16.msra.mxu0 %v316
        %354 = vmatprep.subr.bf16.mxu0 0
        %355 = vmatpush1.bf16.msra.mxu0 %v317
        %356 = vmatprep.subr.bf16.mxu0 0
        %357 = vmatpush1.bf16.msra.mxu0 %v318
        %358 = vmatprep.subr.bf16.mxu0 0
        %359 = vmatpush1.bf16.msra.mxu0 %v319
        %360 = vmatprep.subr.bf16.mxu0 0
        %361 = vmatpush1.bf16.msra.mxu0 %v320
        %362 = vmatprep.subr.bf16.mxu0 0
        %363 = vmatpush1.bf16.msra.mxu0 %v321
        %364 = vmatprep.subr.bf16.mxu0 0
        %365 = vmatpush1.bf16.msra.mxu0 %v322
        %366 = vmatprep.subr.bf16.mxu0 0
        %367 = vmatpush1.bf16.msra.mxu0 %v323
        %368 = vmatprep.subr.bf16.mxu0 0
        %369 = vmatpush1.bf16.msra.mxu0 %v324
        %370 = vmatprep.subr.bf16.mxu0 0
        %371 = vmatpush1.bf16.msra.mxu0 %v325
        %372 = vmatprep.subr.bf16.mxu0 0
        %373 = vmatpush1.bf16.msra.mxu0 %v326
        %374 = vmatprep.subr.bf16.mxu0 0
        %375 = vmatpush1.bf16.msra.mxu0 %v327
        %376 = vmatprep.mubr.bf16.mxu0 %v245
        %377 = vmatmul.mubr.bf16.gmra.mrb[0].mxu0 %v244
        %v378 = vpop.f32.mrb[0].mxu0
        %v379 = vadd.f32 0.0, %v378
        %v380 = vpop.f32.mrb[0].mxu0
        %v381 = vpop.f32.mrb[0].mxu0
        %v382 = vpop.f32.mrb[0].mxu0
        %383 = vdwg.mxu0
        %v384 = vadd.f32 %v207, %v379
        %385 = vst [vmem:[#allocation2] sm:$0xff] %v384
        // Predicated region
        $region41: #{tpu_custom_call.1} parent=27 // pred_check
          %p386 = pneg %p202
        $region42: #{tpu_custom_call.1} parent=27 // pred_check_branch
          %388 = sbr.rel (%p386) target = $region44
        $region43: #{tpu_custom_call.1} parent=27 // pred_region
          %v389 = vld [vmem:[#allocation2] sm:$0xff]
          %390 = vst [vmem:[%s198] sm:$0xff] %v389
        $region44: #{tpu_custom_call.1} parent=27 // pred_fallthru
          _
        %s391 = sand.u32 %s94, 1
        %s392 = scalar_lea.sflag [#allocation5], %s391
        %s393 = sand.u32 %s94, 1
        %s394 = smul.addr %s393, 8
        %s395 = scalar_lea.vmem [#allocation8], %s394
        // Predicated region
        $region45: #{tpu_custom_call.1} parent=27 // pred_check
          %p396 = pneg %p104
        $region46: #{tpu_custom_call.1} parent=27 // pred_check_branch
          %398 = sbr.rel (%p396) target = $region48
        $region47: #{tpu_custom_call.1} parent=27 // pred_region
          %s400 = ssub.s32 128, 128
          %401 = vsyncadd %s392, %s400
          %s402 = smul.addr %s24, 128
          %s403 = scalar_lea.hbm %s2, %s402
          %s405 = sshll.u32 %s395, 4
          %s406 = int_to_ptr.vmem [resolvable:$true] %s405
          %408 = dma.vmem_to_hbm [thread:$0]  %s406, 128, %s403, %s392
        $region48: #{tpu_custom_call.1} parent=27 // pred_fallthru
          _
      $region28: #{tpu_custom_call.1} parent=5 // pred_fallthru
        _
      %p409 = scmp.le.s32.totalorder 2, %s15
      // Predicated region
      $region49: #{tpu_custom_call.1} parent=5 // pred_check
        %p410 = pneg %p409
      $region50: #{tpu_custom_call.1} parent=5 // pred_check_branch
        %412 = sbr.rel (%p410) target = $region52
      $region51: #{tpu_custom_call.1} parent=5 // pred_region
        %s413 = ssub.s32 %s15, 2
        // Predicated region
        $region53: #{tpu_custom_call.1} parent=51 // pred_check
          %p414 = pneg %p110
        $region54: #{tpu_custom_call.1} parent=51 // pred_check_branch
          %416 = sbr.rel (%p414) target = $region56
        $region55: #{tpu_custom_call.1} parent=51 // pred_region
          %s417 = sand.u32 %s95, 1
          %s418 = scalar_lea.sflag [#allocation5], %s417
          %s419 = sand.u32 %s95, 1
          %s420 = smul.addr %s419, 8
          %s421 = scalar_lea.vmem [#allocation8], %s420
          %422 = dma.done %s418, 128
        $region56: #{tpu_custom_call.1} parent=51 // pred_fallthru
          _
      $region52: #{tpu_custom_call.1} parent=5 // pred_fallthru
        _
    $region6: #{tpu_custom_call.1} parent=1 // loop_footer
      %s19 = sadd.s32 1, %s15
    $region7: #{tpu_custom_call.1} parent=1 // loop_footer_branch
      %14 = sbr.rel target = $region3
    $region8: #{tpu_custom_call.1} parent=1 // loop_exit
      _
    %423 = vsyncpa [#allocation4], 1
    %s424 = scalar_lea.sflag [#allocation4], 1
    %425 = vsyncpa %s424, 1
    %426 = vsyncpa [#allocation7], 1
    %s427 = scalar_lea.sflag [#allocation7], 1
    %428 = vsyncpa %s427, 1
    %429 = vsyncpa [#allocation5], 1
    %s430 = scalar_lea.sflag [#allocation5], 1
    %431 = vsyncpa %s430, 1

</llo_original>
